<compile_context>
chip_gen: v7x
topology: tpu7x:2x2x1
jax: 0.10.0
libtpu: 0.0.40
codegen_flags: <defaults>
</compile_context>

<pallas_src>
import numpy as np
import jax
import jax.numpy as jnp
from jax.experimental import pallas as pl
from jax.experimental.pallas import tpu as pltpu


def _round_up(n, m):
    return ((n + m - 1) // m) * m


# ----------------------------------------------------------------------------
# Fused kernel: in-kernel bf16 cast, 2 lane-dense MXU matmuls, bias+ReLU,
# VPU/XLU value head, two narrow output stores (bf16 hidden, f32 value).
# ----------------------------------------------------------------------------
def fused_mlp_kernel(x_ref, w1_ref, b1_ref, w2_ref, b2_ref, vw_ref, vb_ref,
                     actor_ref, value_ref):
    # x: (TB, num_inputs) f32 -> bf16 in-kernel; w1: (num_inputs, 2H) bf16;
    # w2: (2H, 2H) bf16 block-diagonal. Biases / value row stay f32.
    x = x_ref[...].astype(jnp.bfloat16)

    h1 = jnp.dot(x, w1_ref[...], preferred_element_type=jnp.float32)
    h1 = jnp.maximum(h1 + b1_ref[...], 0.0)                 # f32 elementwise

    h2 = jnp.dot(h1.astype(jnp.bfloat16), w2_ref[...],
                 preferred_element_type=jnp.float32)
    h2 = jnp.maximum(h2 + b2_ref[...], 0.0)                 # (TB, 2H): actor||critic

    # Value head: vw is zero over the actor lanes, critic_linear row elsewhere.
    # Multiply on the VPU, reduce on the XLU -> effectively free slots here.
    v = jnp.sum(h2 * vw_ref[...], axis=-1, keepdims=True) + vb_ref[...]  # (TB, 1)

    h = h2.shape[1] // 2
    actor_ref[...] = h2[:, :h].astype(actor_ref.dtype)      # bf16 hidden_actor
    value_ref[...] = v                                       # f32 value


def _choose_tile(batch, tile_b):
    """Batch tile: multiple of 8 sublanes, large (>= 512 preferred for HBM
    roofline), but keep >= 2 grid steps for big batches so v7x's two
    TensorCores both engage on the "parallel" grid axis."""
    tb = min(tile_b, _round_up(batch, 8))
    if batch >= 1024:
        tb = min(tb, _round_up(pl.cdiv(batch, 2), 8))
    return tb


def mlp_base_forward(x, fused_params, tile_b=2048):
    """MLPBase forward hot path.

    x: (B, num_inputs) float32
    fused_params: dict with fused/packed weights (see make_params)
    returns: (value (B, 1) f32, hidden_actor (B, H) bf16)
    """
    B, num_inputs = x.shape
    two_h = fused_params["b1"].shape[1]
    H = two_h // 2

    tb = _choose_tile(B, tile_b)
    b_pad = _round_up(B, tb)
    if b_pad != B:
        x = jnp.pad(x, ((0, b_pad - B), (0, 0)))  # cheap; keeps blocks divisible

    const = lambda b: (0, 0)
    actor_out, value_out = pl.pallas_call(
        fused_mlp_kernel,
        out_shape=(
            jax.ShapeDtypeStruct((b_pad, H), jnp.bfloat16),   # hidden_actor
            jax.ShapeDtypeStruct((b_pad, 1), jnp.float32),    # value
        ),
        grid=(b_pad // tb,),
        in_specs=[
            pl.BlockSpec((tb, num_inputs), lambda b: (b, 0)),   # x tile (f32)
            pl.BlockSpec((num_inputs, two_h), const),           # W1 (resident)
            pl.BlockSpec((1, two_h), const),                    # b1
            pl.BlockSpec((two_h, two_h), const),                # W2 block-diag
            pl.BlockSpec((1, two_h), const),                    # b2
            pl.BlockSpec((1, two_h), const),                    # value row (padded)
            pl.BlockSpec((1, 1), const),                        # value bias
        ],
        out_specs=(
            pl.BlockSpec((tb, H), lambda b: (b, 0)),
            pl.BlockSpec((tb, 1), lambda b: (b, 0)),
        ),
        compiler_params=pltpu.CompilerParams(
            dimension_semantics=("parallel",),
            vmem_limit_bytes=32 * 1024 * 1024),
    )(x, fused_params["w1"], fused_params["b1"], fused_params["w2"],
      fused_params["b2"], fused_params["vw"], fused_params["vb"])

    # Drop padded rows only (narrow bf16/H + f32/1 outputs, no slab re-read).
    return value_out[:B], actor_out[:B]


# ----------------------------------------------------------------------------
# Parameter construction (orthogonal init, zero biases) + fused packing.
# ----------------------------------------------------------------------------
def orthogonal(key, shape, gain):
    rows, cols = shape
    a = jax.random.normal(key, (rows, cols), dtype=jnp.float32)
    if rows < cols:
        a = a.T
    q, r = jnp.linalg.qr(a)
    q = q * jnp.sign(jnp.diag(r))
    if rows < cols:
        q = q.T
    return (gain * q).astype(jnp.float32)


def make_params(key, num_inputs, hidden_size):
    gain = float(np.sqrt(2.0))
    ks = jax.random.split(key, 5)
    H = hidden_size
    zeros = lambda n: jnp.zeros((1, n), dtype=jnp.float32)

    # PyTorch Linear weight is (out, in); transpose to (in, out) for x @ W.
    aw1 = orthogonal(ks[0], (H, num_inputs), gain).T   # (in, H)
    aw2 = orthogonal(ks[1], (H, H), gain).T
    cw1 = orthogonal(ks[2], (H, num_inputs), gain).T
    cw2 = orthogonal(ks[3], (H, H), gain).T
    vw = orthogonal(ks[4], (1, H), gain)               # critic_linear row, (1, H)

    raw = {
        "aw1": aw1, "ab1": zeros(H), "aw2": aw2, "ab2": zeros(H),
        "cw1": cw1, "cb1": zeros(H), "cw2": cw2, "cb2": zeros(H),
        "vw": vw, "vb": jnp.zeros((1, 1), jnp.float32),
    }

    # ---- fused / packed layout for the kernel ----
    # Layer 1: columns [0,H) actor, [H,2H) critic -> (num_inputs, 2H), bf16.
    w1 = jnp.concatenate([aw1, cw1], axis=1).astype(jnp.bfloat16)
    b1 = jnp.concatenate([raw["ab1"], raw["cb1"]], axis=1)
    # Layer 2: block-diagonal (2H, 2H), actor top-left, critic bottom-right.
    w2 = jnp.zeros((2 * H, 2 * H), jnp.float32)
    w2 = w2.at[:H, :H].set(aw2).at[H:, H:].set(cw2)
    w2 = w2.astype(jnp.bfloat16)
    b2 = jnp.concatenate([raw["ab2"], raw["cb2"]], axis=1)
    # Value row padded to 2H lanes (zeros over the actor half), kept f32.
    vw_pad = jnp.concatenate([jnp.zeros((1, H), jnp.float32), vw], axis=1)

    fused = {"w1": w1, "b1": b1, "w2": w2, "b2": b2,
             "vw": vw_pad, "vb": raw["vb"]}
    return fused, raw


# ----------------------------------------------------------------------------
# References.
# ----------------------------------------------------------------------------
def mlp_base_forward_ref_f32(x, raw):
    """Un-fused f32 math mirroring the original PyTorch module."""
    relu = lambda t: jnp.maximum(t, 0.0)
    hc = relu(x @ raw["cw1"] + raw["cb1"])
    hc = relu(hc @ raw["cw2"] + raw["cb2"])
    ha = relu(x @ raw["aw1"] + raw["ab1"])
    ha = relu(ha @ raw["aw2"] + raw["ab2"])
    v = hc @ raw["vw"].T + raw["vb"]
    return v, ha


def mlp_base_forward_ref_fused(x, fused):
    """Pure-JAX version of the exact fused/bf16 math the kernel performs."""
    xb = x.astype(jnp.bfloat16)
    h1 = jnp.maximum(
        jnp.dot(xb, fused["w1"], preferred_element_type=jnp.float32)
        + fused["b1"], 0.0)
    h2 = jnp.maximum(
        jnp.dot(h1.astype(jnp.bfloat16), fused["w2"],
                preferred_element_type=jnp.float32) + fused["b2"], 0.0)
    v = jnp.sum(h2 * fused["vw"], axis=-1, keepdims=True) + fused["vb"]
    H = fused["b1"].shape[1] // 2
    return v, h2[:, :H]


if __name__ == "__main__":
    key = jax.random.PRNGKey(0)
    k_param, k_x = jax.random.split(key)

    batch = 8
    num_inputs = 16
    hidden_size = 64

    fused, raw = make_params(k_param, num_inputs, hidden_size)
    x = jax.random.normal(k_x, (batch, num_inputs), dtype=jnp.float32)
    # Non-recurrent: recurrent_hidden_state_size == 1; hxs passes through.
    rnn_hxs = jnp.zeros((batch, 1), dtype=jnp.float32)
    masks = jnp.ones((batch, 1), dtype=jnp.float32)  # unused when not recurrent
    # TODO(synk): recurrent GRU path (_forward_gru) and the Categorical dist head
    # of Policy.act are not implemented; MLPBase default is recurrent=False.

    value, hidden_actor = mlp_base_forward(x, fused)
    jax.block_until_ready((value, hidden_actor))

    # Tight check against a pure-JAX reference of the identical fused bf16 math
    # (hidden_actor is emitted in bf16 -> compare in f32 with bf16-level tol).
    v_bf, a_bf = mlp_base_forward_ref_fused(x, fused)
    np.testing.assert_allclose(np.asarray(value), np.asarray(v_bf),
                               rtol=1e-3, atol=1e-3)
    np.testing.assert_allclose(np.asarray(hidden_actor, dtype=np.float32),
                               np.asarray(a_bf), rtol=2e-2, atol=2e-2)

    # Loose check against the un-fused f32 math of the original module
    # (bf16 operand rounding bounds the deviation).
    v_f32, a_f32 = mlp_base_forward_ref_f32(x, raw)
    np.testing.assert_allclose(np.asarray(value), np.asarray(v_f32),
                               rtol=1e-1, atol=1e-1)
    np.testing.assert_allclose(np.asarray(hidden_actor, dtype=np.float32),
                               np.asarray(a_f32), rtol=1e-1, atol=1e-1)

    # Full forward() return tuple: (critic_value, hidden_actor, rnn_hxs)
    out = (value, hidden_actor, rnn_hxs)
    assert out[0].shape == (batch, 1)
    assert out[1].shape == (batch, hidden_size)
    assert out[2].shape == (batch, 1)

    print("KERNEL_OK")
</pallas_src>

<mosaic_0001>
module attributes {stable_mosaic.version = 11 : i64} {
  func.func @fused_mlp_kernel(%arg0: i32, %arg1: memref<8x16xf32, #tpu.memory_space<vmem>>, %arg2: memref<16x128xbf16, #tpu.memory_space<vmem>>, %arg3: memref<1x128xf32, #tpu.memory_space<vmem>>, %arg4: memref<128x128xbf16, #tpu.memory_space<vmem>>, %arg5: memref<1x128xf32, #tpu.memory_space<vmem>>, %arg6: memref<1x128xf32, #tpu.memory_space<vmem>>, %arg7: memref<1x1xf32, #tpu.memory_space<vmem>>, %arg8: memref<8x64xbf16, #tpu.memory_space<vmem>>, %arg9: memref<8x1xf32, #tpu.memory_space<vmem>>) attributes {dimension_semantics = [#tpu.dimension_semantics<parallel>], iteration_bounds = array<i64: 1>, scalar_prefetch = 0 : i64, scratch_operands = 0 : i64, tpu.core_type = #tpu.core_type<tc>, window_params = [{transform_indices = @transform_0, window_bounds = array<i64: 8, 16>}, {pipeline_mode = #tpu.pipeline_mode<synchronous>, transform_indices = @transform_1, window_bounds = array<i64: 16, 128>}, {pipeline_mode = #tpu.pipeline_mode<synchronous>, transform_indices = @transform_2, window_bounds = array<i64: 1, 128>}, {pipeline_mode = #tpu.pipeline_mode<synchronous>, transform_indices = @transform_3, window_bounds = array<i64: 128, 128>}, {pipeline_mode = #tpu.pipeline_mode<synchronous>, transform_indices = @transform_4, window_bounds = array<i64: 1, 128>}, {pipeline_mode = #tpu.pipeline_mode<synchronous>, transform_indices = @transform_5, window_bounds = array<i64: 1, 128>}, {pipeline_mode = #tpu.pipeline_mode<synchronous>, transform_indices = @transform_6, window_bounds = array<i64: 1, 1>}, {transform_indices = @transform_7, window_bounds = array<i64: 8, 64>}, {transform_indices = @transform_8, window_bounds = array<i64: 8, 1>}]} {
    %c0 = arith.constant 0 : index
    %c0_0 = arith.constant 0 : index
    %0 = vector.load %arg1[%c0, %c0_0] : memref<8x16xf32, #tpu.memory_space<vmem>>, vector<8x16xf32>
    %1 = arith.truncf %0 : vector<8x16xf32> to vector<8x16xbf16>
    %c0_1 = arith.constant 0 : index
    %c0_2 = arith.constant 0 : index
    %2 = vector.load %arg2[%c0_1, %c0_2] : memref<16x128xbf16, #tpu.memory_space<vmem>>, vector<16x128xbf16>
    %cst = arith.constant dense<0.000000e+00> : vector<8x128xf32>
    %3 = tpu.matmul %1, %2, %cst {dimension_numbers = #tpu.dot_dimension_numbers<[1], [0], [0], [1], [0, 0, 1, 1], [], []>} : vector<8x16xbf16>, vector<16x128xbf16>, vector<8x128xf32> -> vector<8x128xf32>
    %c0_3 = arith.constant 0 : index
    %c0_4 = arith.constant 0 : index
    %4 = vector.load %arg3[%c0_3, %c0_4] : memref<1x128xf32, #tpu.memory_space<vmem>>, vector<1x128xf32>
    %5 = vector.broadcast %4 : vector<1x128xf32> to vector<8x128xf32>
    %6 = arith.addf %3, %5 : vector<8x128xf32>
    %cst_5 = arith.constant 0.000000e+00 : f32
    %7 = vector.broadcast %cst_5 : f32 to vector<8x128xf32>
    %8 = arith.maximumf %6, %7 : vector<8x128xf32>
    %9 = arith.truncf %8 : vector<8x128xf32> to vector<8x128xbf16>
    %c0_6 = arith.constant 0 : index
    %c0_7 = arith.constant 0 : index
    %10 = vector.load %arg4[%c0_6, %c0_7] : memref<128x128xbf16, #tpu.memory_space<vmem>>, vector<128x128xbf16>
    %cst_8 = arith.constant dense<0.000000e+00> : vector<8x128xf32>
    %11 = tpu.matmul %9, %10, %cst_8 {dimension_numbers = #tpu.dot_dimension_numbers<[1], [0], [0], [1], [0, 0, 1, 1], [], []>} : vector<8x128xbf16>, vector<128x128xbf16>, vector<8x128xf32> -> vector<8x128xf32>
    %c0_9 = arith.constant 0 : index
    %c0_10 = arith.constant 0 : index
    %12 = vector.load %arg5[%c0_9, %c0_10] : memref<1x128xf32, #tpu.memory_space<vmem>>, vector<1x128xf32>
    %13 = vector.broadcast %12 : vector<1x128xf32> to vector<8x128xf32>
    %14 = arith.addf %11, %13 : vector<8x128xf32>
    %cst_11 = arith.constant 0.000000e+00 : f32
    %15 = vector.broadcast %cst_11 : f32 to vector<8x128xf32>
    %16 = arith.maximumf %14, %15 : vector<8x128xf32>
    %c0_12 = arith.constant 0 : index
    %c0_13 = arith.constant 0 : index
    %17 = vector.load %arg6[%c0_12, %c0_13] : memref<1x128xf32, #tpu.memory_space<vmem>>, vector<1x128xf32>
    %18 = vector.broadcast %17 : vector<1x128xf32> to vector<8x128xf32>
    %19 = arith.mulf %16, %18 : vector<8x128xf32>
    %cst_14 = arith.constant dense<0.000000e+00> : vector<8xf32>
    %20 = vector.multi_reduction <add>, %19, %cst_14 [1] : vector<8x128xf32> to vector<8xf32>
    %21 = vector.shape_cast %20 : vector<8xf32> to vector<8x1xf32>
    %c0_15 = arith.constant 0 : index
    %c0_16 = arith.constant 0 : index
    %22 = vector.load %arg7[%c0_15, %c0_16] : memref<1x1xf32, #tpu.memory_space<vmem>>, vector<1x1xf32>
    %23 = vector.broadcast %22 : vector<1x1xf32> to vector<8x1xf32>
    %24 = arith.addf %21, %23 : vector<8x1xf32>
    %25 = vector.extract_strided_slice %16 {offsets = [0, 0], sizes = [8, 64], strides = [1, 1]} : vector<8x128xf32> to vector<8x64xf32>
    %26 = arith.truncf %25 : vector<8x64xf32> to vector<8x64xbf16>
    %c0_17 = arith.constant 0 : index
    %c0_18 = arith.constant 0 : index
    %27 = vector.load %arg8[%c0_17, %c0_18] : memref<8x64xbf16, #tpu.memory_space<vmem>>, vector<8x64xbf16>
    tpu.vector_store %arg8[%c0_17, %c0_18], %26 {strides = array<i32>} : memref<8x64xbf16, #tpu.memory_space<vmem>>, vector<8x64xbf16>,
    %c0_19 = arith.constant 0 : index
    %c0_20 = arith.constant 0 : index
    %28 = vector.load %arg9[%c0_19, %c0_20] : memref<8x1xf32, #tpu.memory_space<vmem>>, vector<8x1xf32>
    tpu.vector_store %arg9[%c0_19, %c0_20], %24 {strides = array<i32>} : memref<8x1xf32, #tpu.memory_space<vmem>>, vector<8x1xf32>,
    return
  }
  func.func @transform_0(%arg0: i32) -> (i32, i32) {
    %c0_i32 = arith.constant 0 : i32
    %c0_i32_0 = arith.constant 0 : i32
    return %arg0, %c0_i32 : i32, i32
  }
  func.func @transform_1(%arg0: i32) -> (i32, i32) {
    %c0_i32 = arith.constant 0 : i32
    %c0_i32_0 = arith.constant 0 : i32
    %c0_i32_1 = arith.constant 0 : i32
    return %c0_i32, %c0_i32_0 : i32, i32
  }
  func.func @transform_2(%arg0: i32) -> (i32, i32) {
    %c0_i32 = arith.constant 0 : i32
    %c0_i32_0 = arith.constant 0 : i32
    %c0_i32_1 = arith.constant 0 : i32
    return %c0_i32, %c0_i32_0 : i32, i32
  }
  func.func @transform_3(%arg0: i32) -> (i32, i32) {
    %c0_i32 = arith.constant 0 : i32
    %c0_i32_0 = arith.constant 0 : i32
    %c0_i32_1 = arith.constant 0 : i32
    return %c0_i32, %c0_i32_0 : i32, i32
  }
  func.func @transform_4(%arg0: i32) -> (i32, i32) {
    %c0_i32 = arith.constant 0 : i32
    %c0_i32_0 = arith.constant 0 : i32
    %c0_i32_1 = arith.constant 0 : i32
    return %c0_i32, %c0_i32_0 : i32, i32
  }
  func.func @transform_5(%arg0: i32) -> (i32, i32) {
    %c0_i32 = arith.constant 0 : i32
    %c0_i32_0 = arith.constant 0 : i32
    %c0_i32_1 = arith.constant 0 : i32
    return %c0_i32, %c0_i32_0 : i32, i32
  }
  func.func @transform_6(%arg0: i32) -> (i32, i32) {
    %c0_i32 = arith.constant 0 : i32
    %c0_i32_0 = arith.constant 0 : i32
    %c0_i32_1 = arith.constant 0 : i32
    return %c0_i32, %c0_i32_0 : i32, i32
  }
  func.func @transform_7(%arg0: i32) -> (i32, i32) {
    %c0_i32 = arith.constant 0 : i32
    %c0_i32_0 = arith.constant 0 : i32
    return %arg0, %c0_i32 : i32, i32
  }
  func.func @transform_8(%arg0: i32) -> (i32, i32) {
    %c0_i32 = arith.constant 0 : i32
    %c0_i32_0 = arith.constant 0 : i32
    return %arg0, %c0_i32 : i32, i32
  }
}

</mosaic_0001>

<llo_original>
// kernel: tpu_custom_call.1
$region0: #{tpu_custom_call.1}
  #allocation0 [shape = 'u32[]', space=smem, size = 0x4, offset = 0x4, fixed_abs, tag = 'smem constant byte address 0x4 - core index']
  #allocation1 [shape = 'u32[144,128]{1,0:T(1,128)}', space=vmem, size = 0x12000, scoped, tag = 'internal scratch']
  #allocation2 [shape = 'f32[1,1]{1,0:T(1,128)S(1)}', space=vmem, size = 0x200, scoped, tag = 'scoped memory for tpu_custom_call.1']
  %s0 = inlined_call_operand.hbm [shape: f32[8,16], index: 0, kind: input, shape index: {}]
  %s1 = inlined_call_operand.hbm [shape: bf16[16,128], index: 1, kind: input, shape index: {}]
  %s2 = inlined_call_operand.vmem [shape: f32[1,128], index: 2, kind: input, shape index: {}]
  %s3 = inlined_call_operand.hbm [shape: bf16[128,128], index: 3, kind: input, shape index: {}]
  %s4 = inlined_call_operand.vmem [shape: f32[1,128], index: 4, kind: input, shape index: {}]
  %s5 = inlined_call_operand.vmem [shape: f32[1,128], index: 5, kind: input, shape index: {}]
  %s6 = inlined_call_operand.<no memory space> [shape: f32[1,1], index: 6, kind: input, shape index: {}]
  %s7 = inlined_call_operand.hbm [shape: bf16[8,64], index: 7, kind: output, shape index: {0}]
  %s8 = inlined_call_operand.vmem [shape: f32[8,1], index: 8, kind: output, shape index: {1}]
  %9 = xla_tuple %s7, %s8
  %s10 = sld [smem:[#allocation0]]
  $region58: #{tpu_custom_call.1} parent=0
    _
  %s12 = ssub.s32 1, %s10
  %s13 = scalar_select 0, %s12, %s10
  %v14 = vstv %s6
  %15 = vst [vmem:[#allocation2] sm:$0x1] %v14
  $region1: #{tpu_custom_call.1} parent=0
    #allocation3 [shape = 'u8[4096]{0}', space=vmem, size = 0x1000, scoped, tag = 'input window, operand 0, single buffered']
    #allocation4 [shape = 's32[1]{0}', space=sflag, size = 0x4, scoped, tag = 'scoped memory for tpu_custom_call.1']
    #allocation5 [shape = 's32[1]{0}', space=sflag, size = 0x4, scoped, tag = 'scoped memory for tpu_custom_call.1']
    #allocation6 [shape = 'u8[4096]{0}', space=vmem, size = 0x1000, scoped, tag = 'input window, operand 1, single buffered']
    #allocation7 [shape = 's32[1]{0}', space=sflag, size = 0x4, scoped, tag = 'scoped memory for tpu_custom_call.1']
    #allocation8 [shape = 'u8[32768]{0}', space=vmem, size = 0x8000, scoped, tag = 'input window, operand 3, single buffered']
    #allocation9 [shape = 'u8[2048]{0}', space=vmem, size = 0x800, scoped, tag = 'output window, operand 0, single buffered']
    %16 = vsyncpa [#allocation4], 0
    %17 = vsyncpa [#allocation7], 0
    %18 = vsyncpa [#allocation5], 0
    // Predicated region
    $region2: #{tpu_custom_call.1} parent=1 // pred_check
      _
    $region3: #{tpu_custom_call.1} parent=1 // pred_check_branch
      %20 = sbr.rel (0) target = $region5
    $region4: #{tpu_custom_call.1} parent=1 // pred_region
      %s22 = ssub.s32 128, 128
      %23 = vsyncadd [#allocation4], %s22
      %s25 = sshll.u32 [#allocation3], 4
      %s26 = int_to_ptr.vmem [resolvable:$true] %s25
      %28 = dma.hbm_to_vmem [thread:$0]  %s0, 128, %s26, [#allocation4]
    $region5: #{tpu_custom_call.1} parent=1 // pred_fallthru
      _
    // Predicated region
    $region6: #{tpu_custom_call.1} parent=1 // pred_check
      _
    $region7: #{tpu_custom_call.1} parent=1 // pred_check_branch
      %30 = sbr.rel (0) target = $region9
    $region8: #{tpu_custom_call.1} parent=1 // pred_region
      %s32 = ssub.s32 128, 128
      %33 = vsyncadd [#allocation7], %s32
      %s34 = sshll.u32 [#allocation6], 4
      %s35 = int_to_ptr.vmem [resolvable:$true] %s34
      %40 = dma.hbm_to_vmem [thread:$0]  %s1, 128, %s35, [#allocation7], 64, 64, 4
    $region9: #{tpu_custom_call.1} parent=1 // pred_fallthru
      _
    // Predicated region
    $region10: #{tpu_custom_call.1} parent=1 // pred_check
      _
    $region11: #{tpu_custom_call.1} parent=1 // pred_check_branch
      %42 = sbr.rel (0) target = $region13
    $region12: #{tpu_custom_call.1} parent=1 // pred_region
      _
    $region13: #{tpu_custom_call.1} parent=1 // pred_fallthru
      _
    // Predicated region
    $region14: #{tpu_custom_call.1} parent=1 // pred_check
      _
    $region15: #{tpu_custom_call.1} parent=1 // pred_check_branch
      %44 = sbr.rel (0) target = $region17
    $region16: #{tpu_custom_call.1} parent=1 // pred_region
      %s46 = ssub.s32 1024, 1024
      %47 = vsyncadd [#allocation7], %s46
      %s48 = sshll.u32 [#allocation8], 4
      %s49 = int_to_ptr.vmem [resolvable:$true] %s48
      %54 = dma.hbm_to_vmem [thread:$0]  %s3, 1024, %s49, [#allocation7], 64, 64, 4
    $region17: #{tpu_custom_call.1} parent=1 // pred_fallthru
      _
    // Predicated region
    $region18: #{tpu_custom_call.1} parent=1 // pred_check
      _
    $region19: #{tpu_custom_call.1} parent=1 // pred_check_branch
      %56 = sbr.rel (0) target = $region21
    $region20: #{tpu_custom_call.1} parent=1 // pred_region
      _
    $region21: #{tpu_custom_call.1} parent=1 // pred_fallthru
      _
    // Predicated region
    $region22: #{tpu_custom_call.1} parent=1 // pred_check
      _
    $region23: #{tpu_custom_call.1} parent=1 // pred_check_branch
      %58 = sbr.rel (0) target = $region25
    $region24: #{tpu_custom_call.1} parent=1 // pred_region
      _
    $region25: #{tpu_custom_call.1} parent=1 // pred_fallthru
      _
    // Predicated region
    $region26: #{tpu_custom_call.1} parent=1 // pred_check
      _
    $region27: #{tpu_custom_call.1} parent=1 // pred_check_branch
      %60 = sbr.rel (0) target = $region29
    $region28: #{tpu_custom_call.1} parent=1 // pred_region
      _
    $region29: #{tpu_custom_call.1} parent=1 // pred_fallthru
      _
    // Predicated region
    $region30: #{tpu_custom_call.1} parent=1 // pred_check
      _
    $region31: #{tpu_custom_call.1} parent=1 // pred_check_branch
      %62 = sbr.rel (0) target = $region33
    $region32: #{tpu_custom_call.1} parent=1 // pred_region
      %63 = dma.done [#allocation4], 128
    $region33: #{tpu_custom_call.1} parent=1 // pred_fallthru
      _
    // Predicated region
    $region34: #{tpu_custom_call.1} parent=1 // pred_check
      _
    $region35: #{tpu_custom_call.1} parent=1 // pred_check_branch
      %65 = sbr.rel (0) target = $region37
    $region36: #{tpu_custom_call.1} parent=1 // pred_region
      %66 = dma.done [#allocation7], 128
    $region37: #{tpu_custom_call.1} parent=1 // pred_fallthru
      _
    // Predicated region
    $region38: #{tpu_custom_call.1} parent=1 // pred_check
      _
    $region39: #{tpu_custom_call.1} parent=1 // pred_check_branch
      %68 = sbr.rel (0) target = $region41
    $region40: #{tpu_custom_call.1} parent=1 // pred_region
      %69 = dma.done [#allocation7], 1024
    $region41: #{tpu_custom_call.1} parent=1 // pred_fallthru
      _
    %v71 = vld [vmem:[#allocation3] sm:$0xff]
    %v72 = vpack.c.bf16 %v71, %v71
    %v73 = vld [vmem:[#allocation6] sm:$0xf]
    %v74 = vld [vmem:[#allocation6 + $0x4] sm:$0xf]
    %v75 = vld [vmem:[%s2] sm:$0x1]
    %v77 = vlaneseq
    %v78 = vshrl.u32 %v77, 7
    %v79 = vsub.s32 0, %v78
    %v80 = vrot.slane %v75, %v79
    %v84 = vunpack.c.l.b16 %v73
    %v85 = vunpack.c.l.b16 %v74
    %v86 = vpack.c.b16 %v85, %v84
    %vm88 = vcmask 130048
    %v90 = vsel %vm88, %v72, 0
    %92 = vmatprep.subr.bf16.mxu0 0
    %93 = vmatpush1.bf16.msra.mxu0 %v86
    %94 = vmatprep.subr.bf16.mxu0 0
    %95 = vmatpush1.bf16.msra.mxu0 0
    %96 = vmatprep.subr.bf16.mxu0 0
    %97 = vmatpush1.bf16.msra.mxu0 0
    %98 = vmatprep.subr.bf16.mxu0 0
    %99 = vmatpush1.bf16.msra.mxu0 0
    %100 = vmatprep.subr.bf16.mxu0 0
    %101 = vmatpush1.bf16.msra.mxu0 0
    %102 = vmatprep.subr.bf16.mxu0 0
    %103 = vmatpush1.bf16.msra.mxu0 0
    %104 = vmatprep.subr.bf16.mxu0 0
    %105 = vmatpush1.bf16.msra.mxu0 0
    %106 = vmatprep.subr.bf16.mxu0 0
    %107 = vmatpush1.bf16.msra.mxu0 0
    %108 = vmatprep.subr.bf16.mxu0 0
    %109 = vmatpush1.bf16.msra.mxu0 0
    %110 = vmatprep.subr.bf16.mxu0 0
    %111 = vmatpush1.bf16.msra.mxu0 0
    %112 = vmatprep.subr.bf16.mxu0 0
    %113 = vmatpush1.bf16.msra.mxu0 0
    %114 = vmatprep.subr.bf16.mxu0 0
    %115 = vmatpush1.bf16.msra.mxu0 0
    %116 = vmatprep.subr.bf16.mxu0 0
    %117 = vmatpush1.bf16.msra.mxu0 0
    %118 = vmatprep.subr.bf16.mxu0 0
    %119 = vmatpush1.bf16.msra.mxu0 0
    %120 = vmatprep.subr.bf16.mxu0 0
    %121 = vmatpush1.bf16.msra.mxu0 0
    %122 = vmatprep.subr.bf16.mxu0 0
    %123 = vmatpush1.bf16.msra.mxu0 0
    %124 = vmatprep.mubr.bf16.mxu0 0
    %125 = vmatmul.mubr.bf16.gmra.mrb[0].mxu0 %v90
    %v126 = vpop.f32.mrb[0].mxu0
    %v127 = vadd.f32 %v80, %v126
    %v128 = vpop.f32.mrb[0].mxu0
    %v129 = vpop.f32.mrb[0].mxu0
    %v130 = vpop.f32.mrb[0].mxu0
    %131 = vdwg.mxu0
    %v132 = vmax.f32 %v127, 0.0
    %v133 = vpack.c.bf16 %v132, %v132
    %v134 = vld [vmem:[#allocation8] sm:$0xf]
    %v135 = vld [vmem:[#allocation8 + $0x4] sm:$0xf]
    %v136 = vld [vmem:[#allocation8 + $0x8] sm:$0xf]
    %v137 = vld [vmem:[#allocation8 + $0xc] sm:$0xf]
    %v138 = vld [vmem:[#allocation8 + $0x10] sm:$0xf]
    %v139 = vld [vmem:[#allocation8 + $0x14] sm:$0xf]
    %v140 = vld [vmem:[#allocation8 + $0x18] sm:$0xf]
    %v141 = vld [vmem:[#allocation8 + $0x1c] sm:$0xf]
    %v142 = vld [vmem:[#allocation8 + $0x20] sm:$0xf]
    %v143 = vld [vmem:[#allocation8 + $0x24] sm:$0xf]
    %v144 = vld [vmem:[#allocation8 + $0x28] sm:$0xf]
    %v145 = vld [vmem:[#allocation8 + $0x2c] sm:$0xf]
    %v146 = vld [vmem:[#allocation8 + $0x30] sm:$0xf]
    %v147 = vld [vmem:[#allocation8 + $0x34] sm:$0xf]
    %v148 = vld [vmem:[#allocation8 + $0x38] sm:$0xf]
    %v149 = vld [vmem:[#allocation8 + $0x3c] sm:$0xf]
    %v150 = vld [vmem:[%s4] sm:$0x1]
    %v152 = vlaneseq
    %v153 = vshrl.u32 %v152, 7
    %v154 = vsub.s32 0, %v153
    %v155 = vrot.slane %v150, %v154
    %v173 = vunpack.c.l.b16 %v134
    %v174 = vunpack.c.l.b16 %v135
    %v175 = vunpack.c.l.b16 %v136
    %v176 = vunpack.c.l.b16 %v137
    %v177 = vunpack.c.l.b16 %v138
    %v178 = vunpack.c.l.b16 %v139
    %v179 = vunpack.c.l.b16 %v140
    %v180 = vunpack.c.l.b16 %v141
    %v181 = vunpack.c.l.b16 %v142
    %v182 = vunpack.c.l.b16 %v143
    %v183 = vunpack.c.l.b16 %v144
    %v184 = vunpack.c.l.b16 %v145
    %v185 = vunpack.c.l.b16 %v146
    %v186 = vunpack.c.l.b16 %v147
    %v187 = vunpack.c.l.b16 %v148
    %v188 = vunpack.c.l.b16 %v149
    %v189 = vpack.c.b16 %v174, %v173
    %v190 = vpack.c.b16 %v176, %v175
    %v191 = vpack.c.b16 %v178, %v177
    %v192 = vpack.c.b16 %v180, %v179
    %v193 = vpack.c.b16 %v182, %v181
    %v194 = vpack.c.b16 %v184, %v183
    %v195 = vpack.c.b16 %v186, %v185
    %v196 = vpack.c.b16 %v188, %v187
    %205 = vmatprep.subr.bf16.mxu0 0
    %206 = vmatpush1.bf16.msra.mxu0 %v189
    %207 = vmatprep.subr.bf16.mxu0 0
    %208 = vmatpush1.bf16.msra.mxu0 %v190
    %209 = vmatprep.subr.bf16.mxu0 0
    %210 = vmatpush1.bf16.msra.mxu0 %v191
    %211 = vmatprep.subr.bf16.mxu0 0
    %212 = vmatpush1.bf16.msra.mxu0 %v192
    %213 = vmatprep.subr.bf16.mxu0 0
    %214 = vmatpush1.bf16.msra.mxu0 %v193
    %215 = vmatprep.subr.bf16.mxu0 0
    %216 = vmatpush1.bf16.msra.mxu0 %v194
    %217 = vmatprep.subr.bf16.mxu0 0
    %218 = vmatpush1.bf16.msra.mxu0 %v195
    %219 = vmatprep.subr.bf16.mxu0 0
    %220 = vmatpush1.bf16.msra.mxu0 %v196
    %221 = vmatprep.subr.bf16.mxu0 0
    %222 = vmatpush1.bf16.msra.mxu0 0
    %223 = vmatprep.subr.bf16.mxu0 0
    %224 = vmatpush1.bf16.msra.mxu0 0
    %225 = vmatprep.subr.bf16.mxu0 0
    %226 = vmatpush1.bf16.msra.mxu0 0
    %227 = vmatprep.subr.bf16.mxu0 0
    %228 = vmatpush1.bf16.msra.mxu0 0
    %229 = vmatprep.subr.bf16.mxu0 0
    %230 = vmatpush1.bf16.msra.mxu0 0
    %231 = vmatprep.subr.bf16.mxu0 0
    %232 = vmatpush1.bf16.msra.mxu0 0
    %233 = vmatprep.subr.bf16.mxu0 0
    %234 = vmatpush1.bf16.msra.mxu0 0
    %235 = vmatprep.subr.bf16.mxu0 0
    %236 = vmatpush1.bf16.msra.mxu0 0
    %237 = vmatprep.mubr.bf16.mxu0 0
    %238 = vmatmul.mubr.bf16.gmra.mrb[0].mxu0 %v133
    %v239 = vpop.f32.mrb[0].mxu0
    %v240 = vadd.f32 %v155, %v239
    %v241 = vpop.f32.mrb[0].mxu0
    %v242 = vpop.f32.mrb[0].mxu0
    %v243 = vpop.f32.mrb[0].mxu0
    %244 = vdwg.mxu0
    %v245 = vmax.f32 %v240, 0.0
    %v246 = vld [vmem:[%s5] sm:$0x1]
    %v248 = vlaneseq
    %v249 = vshrl.u32 %v248, 7
    %v250 = vsub.s32 0, %v249
    %v251 = vrot.slane %v246, %v250
    %v253 = vmul.f32 %v245, %v251
    %254 = vadd.xlane.f32.xlu0 %v253
    %v255 = vpop.xlane.xlu0 %254
    %v256 = vld [vmem:[#allocation2] sm:$0x1]
    %v258 = vlaneseq
    %v259 = vshrl.u32 %v258, 7
    %v260 = vsub.s32 0, %v259
    %v261 = vrot.slane %v256, %v260
    %v263 = vadd.f32 %v255, %v261
    %v264 = vpack.c.bf16 %v245, %v245
    %vm265 = vcmask 519168
    %266 = vst.msk [vmem:[#allocation9] sm:$0xf] %vm265, %v264
    %vm267 = vcmask 7168
    %268 = vst.msk [vmem:[%s8] sm:$0xff] %vm267, %v263
    // Predicated region
    $region42: #{tpu_custom_call.1} parent=1 // pred_check
      _
    $region43: #{tpu_custom_call.1} parent=1 // pred_check_branch
      %270 = sbr.rel (0) target = $region45
    $region44: #{tpu_custom_call.1} parent=1 // pred_region
      %s272 = ssub.s32 64, 64
      %273 = vsyncadd [#allocation5], %s272
      %s275 = sshll.u32 [#allocation9], 4
      %s276 = int_to_ptr.vmem [resolvable:$true] %s275
      %278 = dma.vmem_to_hbm [thread:$0]  %s276, 64, %s7, [#allocation5]
    $region45: #{tpu_custom_call.1} parent=1 // pred_fallthru
      _
    // Predicated region
    $region46: #{tpu_custom_call.1} parent=1 // pred_check
      _
    $region47: #{tpu_custom_call.1} parent=1 // pred_check_branch
      %280 = sbr.rel (0) target = $region49
    $region48: #{tpu_custom_call.1} parent=1 // pred_region
      _
    $region49: #{tpu_custom_call.1} parent=1 // pred_fallthru
      _
    // Predicated region
    $region50: #{tpu_custom_call.1} parent=1 // pred_check
      _
    $region51: #{tpu_custom_call.1} parent=1 // pred_check_branch
      %282 = sbr.rel (0) target = $region53
    $region52: #{tpu_custom_call.1} parent=1 // pred_region
      %283 = dma.done [#allocation5], 64
    $region53: #{tpu_custom_call.1} parent=1 // pred_fallthru
      _
    // Predicated region
    $region54: #{tpu_custom_call.1} parent=1 // pred_check
      _
    $region55: #{tpu_custom_call.1} parent=1 // pred_check_branch
      %285 = sbr.rel (0) target = $region57
    $region56: #{tpu_custom_call.1} parent=1 // pred_region
      _
    $region57: #{tpu_custom_call.1} parent=1 // pred_fallthru
      _
    %286 = vsyncpa [#allocation4], 1
    %287 = vsyncpa [#allocation7], 1
    %288 = vsyncpa [#allocation5], 1

</llo_original>
